<compile_context>
chip_gen: v5e
topology: v5e:2x2
jax: 0.10.0
libtpu: 0.0.40
codegen_flags: <defaults>
</compile_context>

<pallas_src>
import functools

import jax
import jax.numpy as jnp
from jax.experimental import pallas as pl
from jax.experimental.pallas import tpu as pltpu

CONCEPT_ORDER = (
    "speech_rate",
    "pause_ratio",
    "lexical_richness",
    "syntactic_complexity",
    "alpha_power",
    "theta_beta_ratio",
    "gamma_connectivity",
)
CONCEPT_DIM = 7
PADDED_CONCEPT_DIM = 8      # pad feature dim to a full sublane group
MAX_BATCH_TILE = 4096       # rows per grid step (fits 32 MiB scoped VMEM on all gens)
MIN_SPLIT_BATCH = 512       # above this, force >=2 grid blocks (v7x has 2 TCs)
LANE = 128                  # TPU lane width; MXU class dim padded to this
VMEM_LIMIT_BYTES = 32 * 1024 * 1024


def _round_up(x, m):
    return pl.cdiv(x, m) * m


def _classifier_kernel(
    num_classes,
    x_ref,
    w1_ref, b1_ref,
    w2_ref, b2_ref,
    w3_ref, b3_ref,
    w4_ref, b4_ref,
    logits_ref,
):
    # x is already bf16 (cast once in the wrapper).
    x = x_ref[...]

    # Linear(7->256) + ReLU   (Dropout = identity in eval mode)
    h1 = jnp.dot(x, w1_ref[...], preferred_element_type=jnp.float32) + b1_ref[...]
    h1 = jnp.maximum(h1, 0.0)

    # Linear(256->128) + ReLU   (BN(256) folded into W2/b2)
    h2 = jnp.dot(h1.astype(jnp.bfloat16), w2_ref[...],
                 preferred_element_type=jnp.float32) + b2_ref[...]
    h2 = jnp.maximum(h2, 0.0)

    # Linear(128->64) + ReLU   (BN(128) folded into W3/b3)
    h3 = jnp.dot(h2.astype(jnp.bfloat16), w3_ref[...],
                 preferred_element_type=jnp.float32) + b3_ref[...]
    h3 = jnp.maximum(h3, 0.0)

    # Linear(64->C): MXU fed with a 128-lane padded W4; only the first
    # num_classes columns are written back (narrow writeback, masked store).
    logits = jnp.dot(h3.astype(jnp.bfloat16), w4_ref[...],
                     preferred_element_type=jnp.float32) + b4_ref[...]
    logits_ref[...] = logits[:, :num_classes]


@functools.partial(jax.jit, static_argnames=("num_classes",))
def _run_classifier(x, params, num_classes):
    batch = x.shape[0]

    # One bf16 cast in the wrapper; pad feature dim 7 -> 8 with zero columns.
    x = x.astype(jnp.bfloat16)
    x = jnp.pad(x, ((0, 0), (0, PADDED_CONCEPT_DIM - x.shape[1])))

    # Balanced batch tiling: bounded padding, >=2 blocks for larger batches so
    # the "parallel" axis shards across v7x's two TensorCores.
    n_blocks = pl.cdiv(batch, MAX_BATCH_TILE)
    if batch > MIN_SPLIT_BATCH:
        n_blocks = max(n_blocks, 2)
    tb = _round_up(pl.cdiv(batch, n_blocks), 8)
    padded_batch = n_blocks * tb
    if padded_batch != batch:
        x = jnp.pad(x, ((0, padded_batch - batch), (0, 0)))

    def const_spec(arr):
        # Full-array block, constant index map -> DMA'd once, VMEM-resident.
        return pl.BlockSpec(arr.shape, lambda i: (0, 0))

    in_specs = [
        pl.BlockSpec((tb, PADDED_CONCEPT_DIM), lambda i: (i, 0)),
        const_spec(params["w1"]), const_spec(params["b1"]),
        const_spec(params["w2"]), const_spec(params["b2"]),
        const_spec(params["w3"]), const_spec(params["b3"]),
        const_spec(params["w4"]), const_spec(params["b4"]),
    ]
    out_specs = pl.BlockSpec((tb, num_classes), lambda i: (i, 0))
    out_shape = jax.ShapeDtypeStruct((padded_batch, num_classes), jnp.float32)

    logits_p = pl.pallas_call(
        functools.partial(_classifier_kernel, num_classes),
        out_shape=out_shape,
        grid_spec=pltpu.PrefetchScalarGridSpec(
            num_scalar_prefetch=0,
            grid=(n_blocks,),
            in_specs=in_specs,
            out_specs=out_specs,
        ),
        compiler_params=pltpu.CompilerParams(
            dimension_semantics=("parallel",),
            vmem_limit_bytes=VMEM_LIMIT_BYTES),
    )(
        x,
        params["w1"], params["b1"],
        params["w2"], params["b2"],
        params["w3"], params["b3"],
        params["w4"], params["b4"],
    )

    logits = logits_p[:batch]
    # Softmax / argmax over num_classes columns: negligible XLA work, keeps the
    # kernel writeback minimal (memory-bound regime).
    probs = jax.nn.softmax(logits, axis=1)
    preds = jnp.argmax(logits, axis=1).astype(jnp.int32)
    return logits, probs, preds


def init_params(key, num_classes):
    """Deterministic synthetic parameters with the module's shapes,
    pre-folded (eval-mode BN), padded and cast for the kernel."""
    ks = jax.random.split(key, 8)

    def linear(kw, kb, fan_in, fan_out):
        bound = 1.0 / (fan_in ** 0.5)
        w = jax.random.uniform(kw, (fan_in, fan_out), jnp.float32, -bound, bound)
        b = jax.random.uniform(kb, (1, fan_out), jnp.float32, -bound, bound)
        return w, b

    w1, b1 = linear(ks[0], ks[1], CONCEPT_DIM, 256)
    w2, b2 = linear(ks[2], ks[3], 256, 128)
    w3, b3 = linear(ks[4], ks[5], 128, 64)
    w4, b4 = linear(ks[6], ks[7], 64, num_classes)

    # BatchNorm1d eval-mode affine (gamma=1, beta=0, running_mean=0, running_var=1)
    eps = 1e-5

    def bn_affine(dim):
        gamma = jnp.ones((1, dim), jnp.float32)
        beta = jnp.zeros((1, dim), jnp.float32)
        mean = jnp.zeros((1, dim), jnp.float32)
        var = jnp.ones((1, dim), jnp.float32)
        scale = gamma / jnp.sqrt(var + eps)
        shift = beta - mean * scale
        return scale, shift

    s1, t1 = bn_affine(256)
    s2, t2 = bn_affine(128)

    # Exact algebraic fold of the eval-mode BN affine into the next Linear:
    #   (h*s + t) @ W + b  ==  h @ (diag(s) @ W) + (t @ W + b)
    w2f = s1.reshape(-1, 1) * w2
    b2f = t1 @ w2 + b2
    w3f = s2.reshape(-1, 1) * w3
    b3f = t2 @ w3 + b3

    # Pad feature dim 7 -> 8 (zero rows); pad class dim to a lane multiple with
    # zeros (padded columns are never written back).
    cp = _round_up(num_classes, LANE)
    w1p = jnp.pad(w1, ((0, PADDED_CONCEPT_DIM - CONCEPT_DIM), (0, 0)))
    w4p = jnp.pad(w4, ((0, 0), (0, cp - num_classes)))
    b4p = jnp.pad(b4, ((0, 0), (0, cp - num_classes)))

    # bf16 matmul operands (MXU-native); biases stay f32.
    return {
        "w1": w1p.astype(jnp.bfloat16), "b1": b1,
        "w2": w2f.astype(jnp.bfloat16), "b2": b2f,
        "w3": w3f.astype(jnp.bfloat16), "b3": b3f,
        "w4": w4p.astype(jnp.bfloat16), "b4": b4p,
    }


def process_concepts(concepts):
    """Glue: mirror of _process_concepts — stack 7 concept streams to (B, 7)."""
    first = list(concepts.values())[0]
    batch = first.shape[0]
    cols = []
    for name in CONCEPT_ORDER:
        if name in concepts:
            v = concepts[name]
            if v.ndim > 1:
                v = jnp.squeeze(v, axis=-1)
            cols.append(v.astype(jnp.float32))
        else:
            cols.append(jnp.zeros((batch,), jnp.float32))
    return jnp.stack(cols, axis=1)


def simple_classifier_forward(concepts, params, num_classes, targets=None):
    x = process_concepts(concepts)
    logits, probs, preds = _run_classifier(x, params, num_classes)
    outputs = {"logits": logits, "predictions": preds, "probabilities": probs}
    if targets is not None:
        # F.cross_entropy (mean reduction) over the small class dim.
        log_probs = jax.nn.log_softmax(logits, axis=1)
        picked = jnp.take_along_axis(log_probs, targets[:, None], axis=1)[:, 0]
        outputs["loss"] = -jnp.mean(picked)
    return outputs


if __name__ == "__main__":
    num_classes = 4
    batch = 8

    key = jax.random.PRNGKey(0)
    pkey, dkey, tkey = jax.random.split(key, 3)
    params = init_params(pkey, num_classes)

    # Deterministic concept dict; some entries (B,), some (B, 1), one missing
    # to exercise the zero-fill fallback branch.
    ckeys = jax.random.split(dkey, len(CONCEPT_ORDER))
    concepts = {}
    for i, name in enumerate(CONCEPT_ORDER):
        if name == "theta_beta_ratio":
            continue  # missing -> zeros, like the PyTorch fallback
        shape = (batch, 1) if i % 2 == 0 else (batch,)
        concepts[name] = jax.random.normal(ckeys[i], shape, jnp.float32)

    targets = jax.random.randint(tkey, (batch,), 0, num_classes)

    outputs = simple_classifier_forward(concepts, params, num_classes, targets)
    jax.block_until_ready(outputs)

    assert outputs["logits"].shape == (batch, num_classes)
    assert outputs["probabilities"].shape == (batch, num_classes)
    assert outputs["predictions"].shape == (batch,)
    assert bool(jnp.all(jnp.isfinite(outputs["logits"])))
    assert bool(jnp.allclose(jnp.sum(outputs["probabilities"], axis=1), 1.0, atol=1e-4))
    assert bool(jnp.all((outputs["predictions"] >= 0)
                        & (outputs["predictions"] < num_classes)))
    assert bool(jnp.isfinite(outputs["loss"]))
    print("KERNEL_OK")
</pallas_src>

<mosaic_0001>
module attributes {stable_mosaic.version = 11 : i64} {
  func.func @_classifier_kernel(%arg0: i32, %arg1: memref<8x8xbf16, #tpu.memory_space<vmem>>, %arg2: memref<8x256xbf16, #tpu.memory_space<vmem>>, %arg3: memref<1x256xf32, #tpu.memory_space<vmem>>, %arg4: memref<256x128xbf16, #tpu.memory_space<vmem>>, %arg5: memref<1x128xf32, #tpu.memory_space<vmem>>, %arg6: memref<128x64xbf16, #tpu.memory_space<vmem>>, %arg7: memref<1x64xf32, #tpu.memory_space<vmem>>, %arg8: memref<64x128xbf16, #tpu.memory_space<vmem>>, %arg9: memref<1x128xf32, #tpu.memory_space<vmem>>, %arg10: memref<8x4xf32, #tpu.memory_space<vmem>>) attributes {dimension_semantics = [#tpu.dimension_semantics<parallel>], iteration_bounds = array<i64: 1>, scalar_prefetch = 0 : i64, scratch_operands = 0 : i64, tpu.core_type = #tpu.core_type<tc>, window_params = [{transform_indices = @transform_0, window_bounds = array<i64: 8, 8>}, {pipeline_mode = #tpu.pipeline_mode<synchronous>, transform_indices = @transform_1, window_bounds = array<i64: 8, 256>}, {pipeline_mode = #tpu.pipeline_mode<synchronous>, transform_indices = @transform_2, window_bounds = array<i64: 1, 256>}, {pipeline_mode = #tpu.pipeline_mode<synchronous>, transform_indices = @transform_3, window_bounds = array<i64: 256, 128>}, {pipeline_mode = #tpu.pipeline_mode<synchronous>, transform_indices = @transform_4, window_bounds = array<i64: 1, 128>}, {pipeline_mode = #tpu.pipeline_mode<synchronous>, transform_indices = @transform_5, window_bounds = array<i64: 128, 64>}, {pipeline_mode = #tpu.pipeline_mode<synchronous>, transform_indices = @transform_6, window_bounds = array<i64: 1, 64>}, {pipeline_mode = #tpu.pipeline_mode<synchronous>, transform_indices = @transform_7, window_bounds = array<i64: 64, 128>}, {pipeline_mode = #tpu.pipeline_mode<synchronous>, transform_indices = @transform_8, window_bounds = array<i64: 1, 128>}, {transform_indices = @transform_9, window_bounds = array<i64: 8, 4>}]} {
    %c0 = arith.constant 0 : index
    %c0_0 = arith.constant 0 : index
    %0 = vector.load %arg1[%c0, %c0_0] : memref<8x8xbf16, #tpu.memory_space<vmem>>, vector<8x8xbf16>
    %c0_1 = arith.constant 0 : index
    %c0_2 = arith.constant 0 : index
    %1 = vector.load %arg2[%c0_1, %c0_2] : memref<8x256xbf16, #tpu.memory_space<vmem>>, vector<8x256xbf16>
    %cst = arith.constant dense<0.000000e+00> : vector<8x256xf32>
    %2 = tpu.matmul %0, %1, %cst {dimension_numbers = #tpu.dot_dimension_numbers<[1], [0], [0], [1], [0, 0, 1, 1], [], []>} : vector<8x8xbf16>, vector<8x256xbf16>, vector<8x256xf32> -> vector<8x256xf32>
    %c0_3 = arith.constant 0 : index
    %c0_4 = arith.constant 0 : index
    %3 = vector.load %arg3[%c0_3, %c0_4] : memref<1x256xf32, #tpu.memory_space<vmem>>, vector<1x256xf32>
    %4 = vector.broadcast %3 : vector<1x256xf32> to vector<8x256xf32>
    %5 = arith.addf %2, %4 : vector<8x256xf32>
    %cst_5 = arith.constant 0.000000e+00 : f32
    %6 = vector.broadcast %cst_5 : f32 to vector<8x256xf32>
    %7 = arith.maximumf %5, %6 : vector<8x256xf32>
    %8 = arith.truncf %7 : vector<8x256xf32> to vector<8x256xbf16>
    %c0_6 = arith.constant 0 : index
    %c0_7 = arith.constant 0 : index
    %9 = vector.load %arg4[%c0_6, %c0_7] : memref<256x128xbf16, #tpu.memory_space<vmem>>, vector<256x128xbf16>
    %cst_8 = arith.constant dense<0.000000e+00> : vector<8x128xf32>
    %10 = tpu.matmul %8, %9, %cst_8 {dimension_numbers = #tpu.dot_dimension_numbers<[1], [0], [0], [1], [0, 0, 1, 1], [], []>} : vector<8x256xbf16>, vector<256x128xbf16>, vector<8x128xf32> -> vector<8x128xf32>
    %c0_9 = arith.constant 0 : index
    %c0_10 = arith.constant 0 : index
    %11 = vector.load %arg5[%c0_9, %c0_10] : memref<1x128xf32, #tpu.memory_space<vmem>>, vector<1x128xf32>
    %12 = vector.broadcast %11 : vector<1x128xf32> to vector<8x128xf32>
    %13 = arith.addf %10, %12 : vector<8x128xf32>
    %cst_11 = arith.constant 0.000000e+00 : f32
    %14 = vector.broadcast %cst_11 : f32 to vector<8x128xf32>
    %15 = arith.maximumf %13, %14 : vector<8x128xf32>
    %16 = arith.truncf %15 : vector<8x128xf32> to vector<8x128xbf16>
    %c0_12 = arith.constant 0 : index
    %c0_13 = arith.constant 0 : index
    %17 = vector.load %arg6[%c0_12, %c0_13] : memref<128x64xbf16, #tpu.memory_space<vmem>>, vector<128x64xbf16>
    %cst_14 = arith.constant dense<0.000000e+00> : vector<8x64xf32>
    %18 = tpu.matmul %16, %17, %cst_14 {dimension_numbers = #tpu.dot_dimension_numbers<[1], [0], [0], [1], [0, 0, 1, 1], [], []>} : vector<8x128xbf16>, vector<128x64xbf16>, vector<8x64xf32> -> vector<8x64xf32>
    %c0_15 = arith.constant 0 : index
    %c0_16 = arith.constant 0 : index
    %19 = vector.load %arg7[%c0_15, %c0_16] : memref<1x64xf32, #tpu.memory_space<vmem>>, vector<1x64xf32>
    %20 = vector.broadcast %19 : vector<1x64xf32> to vector<8x64xf32>
    %21 = arith.addf %18, %20 : vector<8x64xf32>
    %cst_17 = arith.constant 0.000000e+00 : f32
    %22 = vector.broadcast %cst_17 : f32 to vector<8x64xf32>
    %23 = arith.maximumf %21, %22 : vector<8x64xf32>
    %24 = arith.truncf %23 : vector<8x64xf32> to vector<8x64xbf16>
    %c0_18 = arith.constant 0 : index
    %c0_19 = arith.constant 0 : index
    %25 = vector.load %arg8[%c0_18, %c0_19] : memref<64x128xbf16, #tpu.memory_space<vmem>>, vector<64x128xbf16>
    %cst_20 = arith.constant dense<0.000000e+00> : vector<8x128xf32>
    %26 = tpu.matmul %24, %25, %cst_20 {dimension_numbers = #tpu.dot_dimension_numbers<[1], [0], [0], [1], [0, 0, 1, 1], [], []>} : vector<8x64xbf16>, vector<64x128xbf16>, vector<8x128xf32> -> vector<8x128xf32>
    %c0_21 = arith.constant 0 : index
    %c0_22 = arith.constant 0 : index
    %27 = vector.load %arg9[%c0_21, %c0_22] : memref<1x128xf32, #tpu.memory_space<vmem>>, vector<1x128xf32>
    %28 = vector.broadcast %27 : vector<1x128xf32> to vector<8x128xf32>
    %29 = arith.addf %26, %28 : vector<8x128xf32>
    %30 = vector.extract_strided_slice %29 {offsets = [0, 0], sizes = [8, 4], strides = [1, 1]} : vector<8x128xf32> to vector<8x4xf32>
    %c0_23 = arith.constant 0 : index
    %c0_24 = arith.constant 0 : index
    %31 = vector.load %arg10[%c0_23, %c0_24] : memref<8x4xf32, #tpu.memory_space<vmem>>, vector<8x4xf32>
    tpu.vector_store %arg10[%c0_23, %c0_24], %30 {strides = array<i32>} : memref<8x4xf32, #tpu.memory_space<vmem>>, vector<8x4xf32>,
    return
  }
  func.func @transform_0(%arg0: i32) -> (i32, i32) {
    %c0_i32 = arith.constant 0 : i32
    %c0_i32_0 = arith.constant 0 : i32
    return %arg0, %c0_i32 : i32, i32
  }
  func.func @transform_1(%arg0: i32) -> (i32, i32) {
    %c0_i32 = arith.constant 0 : i32
    %c0_i32_0 = arith.constant 0 : i32
    %c0_i32_1 = arith.constant 0 : i32
    return %c0_i32, %c0_i32_0 : i32, i32
  }
  func.func @transform_2(%arg0: i32) -> (i32, i32) {
    %c0_i32 = arith.constant 0 : i32
    %c0_i32_0 = arith.constant 0 : i32
    %c0_i32_1 = arith.constant 0 : i32
    return %c0_i32, %c0_i32_0 : i32, i32
  }
  func.func @transform_3(%arg0: i32) -> (i32, i32) {
    %c0_i32 = arith.constant 0 : i32
    %c0_i32_0 = arith.constant 0 : i32
    %c0_i32_1 = arith.constant 0 : i32
    return %c0_i32, %c0_i32_0 : i32, i32
  }
  func.func @transform_4(%arg0: i32) -> (i32, i32) {
    %c0_i32 = arith.constant 0 : i32
    %c0_i32_0 = arith.constant 0 : i32
    %c0_i32_1 = arith.constant 0 : i32
    return %c0_i32, %c0_i32_0 : i32, i32
  }
  func.func @transform_5(%arg0: i32) -> (i32, i32) {
    %c0_i32 = arith.constant 0 : i32
    %c0_i32_0 = arith.constant 0 : i32
    %c0_i32_1 = arith.constant 0 : i32
    return %c0_i32, %c0_i32_0 : i32, i32
  }
  func.func @transform_6(%arg0: i32) -> (i32, i32) {
    %c0_i32 = arith.constant 0 : i32
    %c0_i32_0 = arith.constant 0 : i32
    %c0_i32_1 = arith.constant 0 : i32
    return %c0_i32, %c0_i32_0 : i32, i32
  }
  func.func @transform_7(%arg0: i32) -> (i32, i32) {
    %c0_i32 = arith.constant 0 : i32
    %c0_i32_0 = arith.constant 0 : i32
    %c0_i32_1 = arith.constant 0 : i32
    return %c0_i32, %c0_i32_0 : i32, i32
  }
  func.func @transform_8(%arg0: i32) -> (i32, i32) {
    %c0_i32 = arith.constant 0 : i32
    %c0_i32_0 = arith.constant 0 : i32
    %c0_i32_1 = arith.constant 0 : i32
    return %c0_i32, %c0_i32_0 : i32, i32
  }
  func.func @transform_9(%arg0: i32) -> (i32, i32) {
    %c0_i32 = arith.constant 0 : i32
    %c0_i32_0 = arith.constant 0 : i32
    return %arg0, %c0_i32 : i32, i32
  }
}

</mosaic_0001>

<llo_original>
// kernel: _run_classifier.1
$region0: #{_run_classifier.1}
  #allocation0 [shape = 'u32[]', space=smem, size = 0x4, offset = 0x4, fixed_abs, tag = 'smem constant byte address 0x4 - core index']
  #allocation1 [shape = 'u32[72,128]{1,0:T(1,128)}', space=vmem, size = 0x9000, scoped, tag = 'internal scratch']
  %s0 = inlined_call_operand.vmem [shape: bf16[8,8], index: 0, kind: input, shape index: {}]
  %s1 = inlined_call_operand.vmem [shape: bf16[8,256], index: 1, kind: input, shape index: {}]
  %s2 = inlined_call_operand.vmem [shape: f32[1,256], index: 2, kind: input, shape index: {}]
  %s3 = inlined_call_operand.hbm [shape: bf16[256,128], index: 3, kind: input, shape index: {}]
  %s4 = inlined_call_operand.vmem [shape: f32[1,128], index: 4, kind: input, shape index: {}]
  %s5 = inlined_call_operand.vmem [shape: bf16[128,64], index: 5, kind: input, shape index: {}]
  %s6 = inlined_call_operand.vmem [shape: f32[1,64], index: 6, kind: input, shape index: {}]
  %s7 = inlined_call_operand.vmem [shape: bf16[64,128], index: 7, kind: input, shape index: {}]
  %s8 = inlined_call_operand.vmem [shape: f32[1,128], index: 8, kind: input, shape index: {}]
  %s9 = inlined_call_operand.vmem [shape: f32[8,4], index: 9, kind: output, shape index: {}]
  %s10 = sld [smem:[#allocation0]]
  $region50: #{_run_classifier.1} parent=0
    _
  %s12 = ssub.s32 1, %s10
  %s13 = scalar_select 0, %s12, %s10
  $region1: #{_run_classifier.1} parent=0
    #allocation2 [shape = 'u8[65536]{0}', space=vmem, size = 0x10000, scoped, tag = 'input window, operand 3, single buffered']
    #allocation3 [shape = 's32[1]{0}', space=sflag, size = 0x4, scoped, tag = 'scoped memory for _run_classifier.1']
    %14 = vsyncpa [#allocation3], 0
    // Predicated region
    $region2: #{_run_classifier.1} parent=1 // pred_check
      _
    $region3: #{_run_classifier.1} parent=1 // pred_check_branch
      %16 = sbr.rel (0) target = $region5
    $region4: #{_run_classifier.1} parent=1 // pred_region
      _
    $region5: #{_run_classifier.1} parent=1 // pred_fallthru
      _
    // Predicated region
    $region6: #{_run_classifier.1} parent=1 // pred_check
      _
    $region7: #{_run_classifier.1} parent=1 // pred_check_branch
      %18 = sbr.rel (0) target = $region9
    $region8: #{_run_classifier.1} parent=1 // pred_region
      _
    $region9: #{_run_classifier.1} parent=1 // pred_fallthru
      _
    // Predicated region
    $region10: #{_run_classifier.1} parent=1 // pred_check
      _
    $region11: #{_run_classifier.1} parent=1 // pred_check_branch
      %20 = sbr.rel (0) target = $region13
    $region12: #{_run_classifier.1} parent=1 // pred_region
      _
    $region13: #{_run_classifier.1} parent=1 // pred_fallthru
      _
    // Predicated region
    $region14: #{_run_classifier.1} parent=1 // pred_check
      _
    $region15: #{_run_classifier.1} parent=1 // pred_check_branch
      %22 = sbr.rel (0) target = $region17
    $region16: #{_run_classifier.1} parent=1 // pred_region
      %24 = vsyncadd [#allocation3], 0
      %s25 = sshll.u32 %s3, 4
      %s26 = int_to_ptr.hbm [resolvable:$true] %s25
      %s27 = sshll.u32 [#allocation2], 4
      %s28 = int_to_ptr.vmem [resolvable:$true] %s27
      %33 = dma.hbm_to_vmem [thread:$0]  %s26, 2048, %s28, [#allocation3], 64, 64, 4
    $region17: #{_run_classifier.1} parent=1 // pred_fallthru
      _
    // Predicated region
    $region18: #{_run_classifier.1} parent=1 // pred_check
      _
    $region19: #{_run_classifier.1} parent=1 // pred_check_branch
      %35 = sbr.rel (0) target = $region21
    $region20: #{_run_classifier.1} parent=1 // pred_region
      _
    $region21: #{_run_classifier.1} parent=1 // pred_fallthru
      _
    // Predicated region
    $region22: #{_run_classifier.1} parent=1 // pred_check
      _
    $region23: #{_run_classifier.1} parent=1 // pred_check_branch
      %37 = sbr.rel (0) target = $region25
    $region24: #{_run_classifier.1} parent=1 // pred_region
      _
    $region25: #{_run_classifier.1} parent=1 // pred_fallthru
      _
    // Predicated region
    $region26: #{_run_classifier.1} parent=1 // pred_check
      _
    $region27: #{_run_classifier.1} parent=1 // pred_check_branch
      %39 = sbr.rel (0) target = $region29
    $region28: #{_run_classifier.1} parent=1 // pred_region
      _
    $region29: #{_run_classifier.1} parent=1 // pred_fallthru
      _
    // Predicated region
    $region30: #{_run_classifier.1} parent=1 // pred_check
      _
    $region31: #{_run_classifier.1} parent=1 // pred_check_branch
      %41 = sbr.rel (0) target = $region33
    $region32: #{_run_classifier.1} parent=1 // pred_region
      _
    $region33: #{_run_classifier.1} parent=1 // pred_fallthru
      _
    // Predicated region
    $region34: #{_run_classifier.1} parent=1 // pred_check
      _
    $region35: #{_run_classifier.1} parent=1 // pred_check_branch
      %43 = sbr.rel (0) target = $region37
    $region36: #{_run_classifier.1} parent=1 // pred_region
      _
    $region37: #{_run_classifier.1} parent=1 // pred_fallthru
      _
    // Predicated region
    $region38: #{_run_classifier.1} parent=1 // pred_check
      _
    $region39: #{_run_classifier.1} parent=1 // pred_check_branch
      %45 = sbr.rel (0) target = $region41
    $region40: #{_run_classifier.1} parent=1 // pred_region
      %47 = dma.done [#allocation3], 2048
    $region41: #{_run_classifier.1} parent=1 // pred_fallthru
      _
    %v49 = vld [vmem:[%s0] sm:$0xf]
    %v50 = vld [vmem:[%s1] sm:$0xff]
    %v51 = vld [vmem:[%s2] sm:$0x3]
    %v53 = vperm.slane %v51, 0
    %v54 = vperm.slane %v51, 1
    %v58 = vunpack.c.l.b16 %v50
    %v59 = vunpack.c.h.b16 %v50
    %v60 = vpack.c.b16 %v58, %v58
    %v61 = vpack.c.b16 %v59, %v59
    %vm62 = vcmask 64512
    %v64 = vsel %vm62, %v49, 0
    %vm66 = vcmask 1043456
    %v68 = vsel %vm66, %v60, 0
    %v71 = vsel %vm66, %v61, 0
    %73 = vmatpush.bf16.msra.mxu0 0
    %74 = vmatpush.bf16.msra.mxu0 0
    %75 = vmatpush.bf16.msra.mxu0 0
    %76 = vmatpush.bf16.msra.mxu0 0
    %77 = vmatpush.bf16.msra.mxu0 0
    %78 = vmatpush.bf16.msra.mxu0 0
    %79 = vmatpush.bf16.msra.mxu0 0
    %80 = vmatpush.bf16.msra.mxu0 %v68
    %81 = vmatmul.bf16.gmra.mxu0 %v64
    %v82 = vpop.f32.mrf.mxu0
    %v83 = vadd.f32 %v53, %v82
    %v84 = vpop.f32.mrf.mxu0
    %85 = vdwg.mxu0
    %86 = vmatpush.bf16.msra.mxu0 0
    %87 = vmatpush.bf16.msra.mxu0 0
    %88 = vmatpush.bf16.msra.mxu0 0
    %89 = vmatpush.bf16.msra.mxu0 0
    %90 = vmatpush.bf16.msra.mxu0 0
    %91 = vmatpush.bf16.msra.mxu0 0
    %92 = vmatpush.bf16.msra.mxu0 0
    %93 = vmatpush.bf16.msra.mxu0 %v71
    %94 = vmatmul.bf16.gmra.mxu0 %v64
    %v95 = vpop.f32.mrf.mxu0
    %v96 = vadd.f32 %v54, %v95
    %v97 = vpop.f32.mrf.mxu0
    %98 = vdwg.mxu0
    %v99 = vmax.f32 %v83, 0.0
    %v100 = vmax.f32 %v96, 0.0
    %v101 = vpack.c.bf16 %v99, %v99
    %v102 = vpack.c.bf16 %v100, %v100
    %v103 = vld [vmem:[#allocation2] sm:$0xf]
    %v104 = vld [vmem:[#allocation2 + $0x4] sm:$0xf]
    %v105 = vld [vmem:[#allocation2 + $0x8] sm:$0xf]
    %v106 = vld [vmem:[#allocation2 + $0xc] sm:$0xf]
    %v107 = vld [vmem:[#allocation2 + $0x10] sm:$0xf]
    %v108 = vld [vmem:[#allocation2 + $0x14] sm:$0xf]
    %v109 = vld [vmem:[#allocation2 + $0x18] sm:$0xf]
    %v110 = vld [vmem:[#allocation2 + $0x1c] sm:$0xf]
    %v111 = vld [vmem:[#allocation2 + $0x20] sm:$0xf]
    %v112 = vld [vmem:[#allocation2 + $0x24] sm:$0xf]
    %v113 = vld [vmem:[#allocation2 + $0x28] sm:$0xf]
    %v114 = vld [vmem:[#allocation2 + $0x2c] sm:$0xf]
    %v115 = vld [vmem:[#allocation2 + $0x30] sm:$0xf]
    %v116 = vld [vmem:[#allocation2 + $0x34] sm:$0xf]
    %v117 = vld [vmem:[#allocation2 + $0x38] sm:$0xf]
    %v118 = vld [vmem:[#allocation2 + $0x3c] sm:$0xf]
    %v119 = vld [vmem:[#allocation2 + $0x40] sm:$0xf]
    %v120 = vld [vmem:[#allocation2 + $0x44] sm:$0xf]
    %v121 = vld [vmem:[#allocation2 + $0x48] sm:$0xf]
    %v122 = vld [vmem:[#allocation2 + $0x4c] sm:$0xf]
    %v123 = vld [vmem:[#allocation2 + $0x50] sm:$0xf]
    %v124 = vld [vmem:[#allocation2 + $0x54] sm:$0xf]
    %v125 = vld [vmem:[#allocation2 + $0x58] sm:$0xf]
    %v126 = vld [vmem:[#allocation2 + $0x5c] sm:$0xf]
    %v127 = vld [vmem:[#allocation2 + $0x60] sm:$0xf]
    %v128 = vld [vmem:[#allocation2 + $0x64] sm:$0xf]
    %v129 = vld [vmem:[#allocation2 + $0x68] sm:$0xf]
    %v130 = vld [vmem:[#allocation2 + $0x6c] sm:$0xf]
    %v131 = vld [vmem:[#allocation2 + $0x70] sm:$0xf]
    %v132 = vld [vmem:[#allocation2 + $0x74] sm:$0xf]
    %v133 = vld [vmem:[#allocation2 + $0x78] sm:$0xf]
    %v134 = vld [vmem:[#allocation2 + $0x7c] sm:$0xf]
    %v135 = vld [vmem:[%s4] sm:$0x1]
    %v137 = vperm.slane %v135, 0
    %v171 = vunpack.c.l.b16 %v103
    %v172 = vunpack.c.l.b16 %v104
    %v173 = vunpack.c.l.b16 %v105
    %v174 = vunpack.c.l.b16 %v106
    %v175 = vunpack.c.l.b16 %v107
    %v176 = vunpack.c.l.b16 %v108
    %v177 = vunpack.c.l.b16 %v109
    %v178 = vunpack.c.l.b16 %v110
    %v179 = vunpack.c.l.b16 %v111
    %v180 = vunpack.c.l.b16 %v112
    %v181 = vunpack.c.l.b16 %v113
    %v182 = vunpack.c.l.b16 %v114
    %v183 = vunpack.c.l.b16 %v115
    %v184 = vunpack.c.l.b16 %v116
    %v185 = vunpack.c.l.b16 %v117
    %v186 = vunpack.c.l.b16 %v118
    %v187 = vunpack.c.l.b16 %v119
    %v188 = vunpack.c.l.b16 %v120
    %v189 = vunpack.c.l.b16 %v121
    %v190 = vunpack.c.l.b16 %v122
    %v191 = vunpack.c.l.b16 %v123
    %v192 = vunpack.c.l.b16 %v124
    %v193 = vunpack.c.l.b16 %v125
    %v194 = vunpack.c.l.b16 %v126
    %v195 = vunpack.c.l.b16 %v127
    %v196 = vunpack.c.l.b16 %v128
    %v197 = vunpack.c.l.b16 %v129
    %v198 = vunpack.c.l.b16 %v130
    %v199 = vunpack.c.l.b16 %v131
    %v200 = vunpack.c.l.b16 %v132
    %v201 = vunpack.c.l.b16 %v133
    %v202 = vunpack.c.l.b16 %v134
    %v203 = vpack.c.b16 %v172, %v171
    %v204 = vpack.c.b16 %v174, %v173
    %v205 = vpack.c.b16 %v176, %v175
    %v206 = vpack.c.b16 %v178, %v177
    %v207 = vpack.c.b16 %v180, %v179
    %v208 = vpack.c.b16 %v182, %v181
    %v209 = vpack.c.b16 %v184, %v183
    %v210 = vpack.c.b16 %v186, %v185
    %v211 = vpack.c.b16 %v188, %v187
    %v212 = vpack.c.b16 %v190, %v189
    %v213 = vpack.c.b16 %v192, %v191
    %v214 = vpack.c.b16 %v194, %v193
    %v215 = vpack.c.b16 %v196, %v195
    %v216 = vpack.c.b16 %v198, %v197
    %v217 = vpack.c.b16 %v200, %v199
    %v218 = vpack.c.b16 %v202, %v201
    %235 = vmatpush.bf16.msra.mxu0 %v210
    %236 = vmatpush.bf16.msra.mxu0 %v209
    %237 = vmatpush.bf16.msra.mxu0 %v208
    %238 = vmatpush.bf16.msra.mxu0 %v207
    %239 = vmatpush.bf16.msra.mxu0 %v206
    %240 = vmatpush.bf16.msra.mxu0 %v205
    %241 = vmatpush.bf16.msra.mxu0 %v204
    %242 = vmatpush.bf16.msra.mxu0 %v203
    %243 = vmatmul.bf16.gmra.mxu0 %v101
    %v244 = vpop.f32.mrf.mxu0
    %v245 = vadd.f32 %v137, %v244
    %v246 = vpop.f32.mrf.mxu0
    %247 = vdwg.mxu0
    %248 = vmatpush.bf16.msra.mxu0 %v218
    %249 = vmatpush.bf16.msra.mxu0 %v217
    %250 = vmatpush.bf16.msra.mxu0 %v216
    %251 = vmatpush.bf16.msra.mxu0 %v215
    %252 = vmatpush.bf16.msra.mxu0 %v214
    %253 = vmatpush.bf16.msra.mxu0 %v213
    %254 = vmatpush.bf16.msra.mxu0 %v212
    %255 = vmatpush.bf16.msra.mxu0 %v211
    %256 = vmatmul.bf16.gmra.mxu0 %v102
    %v257 = vpop.f32.mrf.mxu0
    %v258 = vadd.f32 %v245, %v257
    %v259 = vpop.f32.mrf.mxu0
    %260 = vdwg.mxu0
    %v261 = vmax.f32 %v258, 0.0
    %v262 = vpack.c.bf16 %v261, %v261
    %v263 = vld [vmem:[%s5] sm:$0xf]
    %v264 = vld [vmem:[%s5 + $0x4] sm:$0xf]
    %v265 = vld [vmem:[%s5 + $0x8] sm:$0xf]
    %v266 = vld [vmem:[%s5 + $0xc] sm:$0xf]
    %v267 = vld [vmem:[%s5 + $0x10] sm:$0xf]
    %v268 = vld [vmem:[%s5 + $0x14] sm:$0xf]
    %v269 = vld [vmem:[%s5 + $0x18] sm:$0xf]
    %v270 = vld [vmem:[%s5 + $0x1c] sm:$0xf]
    %v271 = vld [vmem:[%s5 + $0x20] sm:$0xf]
    %v272 = vld [vmem:[%s5 + $0x24] sm:$0xf]
    %v273 = vld [vmem:[%s5 + $0x28] sm:$0xf]
    %v274 = vld [vmem:[%s5 + $0x2c] sm:$0xf]
    %v275 = vld [vmem:[%s5 + $0x30] sm:$0xf]
    %v276 = vld [vmem:[%s5 + $0x34] sm:$0xf]
    %v277 = vld [vmem:[%s5 + $0x38] sm:$0xf]
    %v278 = vld [vmem:[%s5 + $0x3c] sm:$0xf]
    %v279 = vld [vmem:[%s6] sm:$0x1]
    %v281 = vperm.slane %v279, 0
    %v299 = vunpack.c.l.b16 %v263
    %v300 = vunpack.c.l.b16 %v264
    %v301 = vunpack.c.l.b16 %v265
    %v302 = vunpack.c.l.b16 %v266
    %v303 = vunpack.c.l.b16 %v267
    %v304 = vunpack.c.l.b16 %v268
    %v305 = vunpack.c.l.b16 %v269
    %v306 = vunpack.c.l.b16 %v270
    %v307 = vunpack.c.l.b16 %v271
    %v308 = vunpack.c.l.b16 %v272
    %v309 = vunpack.c.l.b16 %v273
    %v310 = vunpack.c.l.b16 %v274
    %v311 = vunpack.c.l.b16 %v275
    %v312 = vunpack.c.l.b16 %v276
    %v313 = vunpack.c.l.b16 %v277
    %v314 = vunpack.c.l.b16 %v278
    %v315 = vpack.c.b16 %v300, %v299
    %v316 = vpack.c.b16 %v302, %v301
    %v317 = vpack.c.b16 %v304, %v303
    %v318 = vpack.c.b16 %v306, %v305
    %v319 = vpack.c.b16 %v308, %v307
    %v320 = vpack.c.b16 %v310, %v309
    %v321 = vpack.c.b16 %v312, %v311
    %v322 = vpack.c.b16 %v314, %v313
    %331 = vmatpush.bf16.msra.mxu0 %v322
    %332 = vmatpush.bf16.msra.mxu0 %v321
    %333 = vmatpush.bf16.msra.mxu0 %v320
    %334 = vmatpush.bf16.msra.mxu0 %v319
    %335 = vmatpush.bf16.msra.mxu0 %v318
    %336 = vmatpush.bf16.msra.mxu0 %v317
    %337 = vmatpush.bf16.msra.mxu0 %v316
    %338 = vmatpush.bf16.msra.mxu0 %v315
    %339 = vmatmul.bf16.gmra.mxu0 %v262
    %v340 = vpop.f32.mrf.mxu0
    %v341 = vadd.f32 %v281, %v340
    %v342 = vpop.f32.mrf.mxu0
    %343 = vdwg.mxu0
    %v344 = vmax.f32 %v341, 0.0
    %v345 = vpack.c.bf16 %v344, %v344
    %v346 = vld [vmem:[%s7] sm:$0xf]
    %v347 = vld [vmem:[%s7 + $0x4] sm:$0xf]
    %v348 = vld [vmem:[%s7 + $0x8] sm:$0xf]
    %v349 = vld [vmem:[%s7 + $0xc] sm:$0xf]
    %v350 = vld [vmem:[%s7 + $0x10] sm:$0xf]
    %v351 = vld [vmem:[%s7 + $0x14] sm:$0xf]
    %v352 = vld [vmem:[%s7 + $0x18] sm:$0xf]
    %v353 = vld [vmem:[%s7 + $0x1c] sm:$0xf]
    %v354 = vld [vmem:[%s8] sm:$0x1]
    %v356 = vperm.slane %v354, 0
    %v366 = vunpack.c.l.b16 %v346
    %v367 = vunpack.c.l.b16 %v347
    %v368 = vunpack.c.l.b16 %v348
    %v369 = vunpack.c.l.b16 %v349
    %v370 = vunpack.c.l.b16 %v350
    %v371 = vunpack.c.l.b16 %v351
    %v372 = vunpack.c.l.b16 %v352
    %v373 = vunpack.c.l.b16 %v353
    %v374 = vpack.c.b16 %v367, %v366
    %v375 = vpack.c.b16 %v369, %v368
    %v376 = vpack.c.b16 %v371, %v370
    %v377 = vpack.c.b16 %v373, %v372
    %vm382 = vcmask 523264
    %v384 = vsel %vm382, %v345, 0
    %386 = vmatpush.bf16.msra.mxu0 0
    %387 = vmatpush.bf16.msra.mxu0 0
    %388 = vmatpush.bf16.msra.mxu0 0
    %389 = vmatpush.bf16.msra.mxu0 0
    %390 = vmatpush.bf16.msra.mxu0 %v377
    %391 = vmatpush.bf16.msra.mxu0 %v376
    %392 = vmatpush.bf16.msra.mxu0 %v375
    %393 = vmatpush.bf16.msra.mxu0 %v374
    %394 = vmatmul.bf16.gmra.mxu0 %v384
    %v395 = vpop.f32.mrf.mxu0
    %v396 = vadd.f32 %v356, %v395
    %v397 = vpop.f32.mrf.mxu0
    %398 = vdwg.mxu0
    %vm399 = vcmask 31744
    %400 = vst.msk [vmem:[%s9] sm:$0xff] %vm399, %v396
    // Predicated region
    $region42: #{_run_classifier.1} parent=1 // pred_check
      _
    $region43: #{_run_classifier.1} parent=1 // pred_check_branch
      %402 = sbr.rel (0) target = $region45
    $region44: #{_run_classifier.1} parent=1 // pred_region
      _
    $region45: #{_run_classifier.1} parent=1 // pred_fallthru
      _
    // Predicated region
    $region46: #{_run_classifier.1} parent=1 // pred_check
      _
    $region47: #{_run_classifier.1} parent=1 // pred_check_branch
      %404 = sbr.rel (0) target = $region49
    $region48: #{_run_classifier.1} parent=1 // pred_region
      _
    $region49: #{_run_classifier.1} parent=1 // pred_fallthru
      _
    %405 = vsyncpa [#allocation3], 1

</llo_original>
